<compile_context>
chip_gen: v7x
topology: tpu7x:2x2x1
jax: 0.10.0
libtpu: 0.0.40
codegen_flags: <defaults>
</compile_context>

<pallas_src>
import functools

import jax
import jax.numpy as jnp
from jax.experimental import pallas as pl
from jax.experimental.pallas import tpu as pltpu


# --------------------------------------------------------------------------- #
# Kernels
# --------------------------------------------------------------------------- #
def _layer_norm_f32(x, gamma, beta, eps):
    """LayerNorm over the last (lane) dim, all in f32."""
    mean = jnp.mean(x, axis=-1, keepdims=True)
    xc = x - mean
    var = jnp.mean(xc * xc, axis=-1, keepdims=True)
    return xc * jax.lax.rsqrt(var + eps) * gamma + beta


def _fused_small_kernel(seq_ref, ws_ref, bs_ref, g_ref, b_ref, out_ref, *,
                        eps, num, C):
    """Single-step fast path: whole problem resident in VMEM, grid=(1,)."""
    x = jnp.dot(seq_ref[...], ws_ref[...], preferred_element_type=jnp.float32)
    x = x + bs_ref[...].astype(jnp.float32)          # (1, num*C) row broadcast
    g = g_ref[...].astype(jnp.float32)
    b = b_ref[...].astype(jnp.float32)
    # Static unroll over groups; slices are lane-aligned (C % 128 == 0) so no
    # layout shuffles, and every store is a full (B, C) lane-dense slab.
    for j in range(num):
        y = _layer_norm_f32(x[:, j * C:(j + 1) * C], g, b, eps)
        out_ref[:, j * C:(j + 1) * C] = y.astype(out_ref.dtype)


def _tiled_kernel(seq_ref, ws_ref, bs_ref, g_ref, b_ref, out_ref, acc_ref, *,
                  eps):
    """General path: grid = (B_tiles, num, K_tiles), K innermost (reduction)."""
    k = pl.program_id(2)

    @pl.when(k == 0)
    def _():
        acc_ref[...] = jnp.zeros_like(acc_ref)

    acc_ref[...] += jnp.dot(seq_ref[...], ws_ref[...],
                            preferred_element_type=jnp.float32)

    @pl.when(k == pl.num_programs(2) - 1)
    def _():
        x = acc_ref[...] + bs_ref[...].astype(jnp.float32)
        y = _layer_norm_f32(x, g_ref[...].astype(jnp.float32),
                            b_ref[...].astype(jnp.float32), eps)
        out_ref[...] = y.astype(out_ref.dtype)        # lane-dense (tb, C) slab


# --------------------------------------------------------------------------- #
# Wrapper
# --------------------------------------------------------------------------- #
def _largest_divisor_tile(dim, max_tile, quantum):
    """Largest multiple of `quantum` that divides `dim` and is <= max_tile;
    falls back to the full extent when no such tile exists."""
    t = (max_tile // quantum) * quantum
    while t >= quantum:
        if dim % t == 0:
            return t
        t -= quantum
    return dim


def seq_projection(seq_embeds, params, *, num_seq_text_embeds, eps=1e-5,
                   compute_dtype=None, out_dtype=jnp.float32,
                   force_general=False):
    """params:
         ws    : (Ds, num*C)  linear weight, stored as nn.Linear.weight.T
                 (store it in bf16 at rest for production: halves HBM traffic)
         bs    : (num*C,)     linear bias          (PyTorch shape)
         gamma : (C,)         LayerNorm weight     (PyTorch shape)
         beta  : (C,)         LayerNorm bias       (PyTorch shape)
    """
    B, Ds = seq_embeds.shape
    num = num_seq_text_embeds
    C = params["gamma"].shape[-1]
    assert params["ws"].shape == (Ds, num * C)
    assert params["bs"].shape == (num * C,)
    assert (C % 128 == 0) or (num == 1), "cross_attention_dim must be lane-aligned"

    ws = params["ws"]
    bs = params["bs"].reshape(1, num * C)
    gamma = params["gamma"].reshape(1, C)
    beta = params["beta"].reshape(1, C)

    # Streamed-operand dtype: default to the weight's stored dtype so no
    # per-call convert of the big weight is emitted.  (Store ws in bf16 at rest
    # to halve weight bytes; bias/LN/accumulation stay f32 below.)
    if compute_dtype is None:
        compute_dtype = ws.dtype
    if ws.dtype != compute_dtype:
        ws = ws.astype(compute_dtype)        # better: keep params at rest in this dtype
    if seq_embeds.dtype != compute_dtype:
        seq_embeds = seq_embeds.astype(compute_dtype)
    cbytes = jnp.dtype(compute_dtype).itemsize
    obytes = jnp.dtype(out_dtype).itemsize

    cost = pl.CostEstimate(
        flops=2 * B * Ds * num * C + 8 * B * num * C,
        transcendentals=B * num,
        bytes_accessed=(B * Ds + Ds * num * C + num * C + 2 * C) * cbytes
        + B * num * C * obytes,
    )

    weight_bytes = Ds * num * C * cbytes
    use_fast = (not force_general
                and num <= 64
                and weight_bytes <= 2 * 1024 * 1024
                and B * Ds * cbytes <= 1024 * 1024
                and B * num * C * 4 <= 2 * 1024 * 1024)

    if use_fast:
        # ------------------------------------------------------------------- #
        # Small-problem fast path: one grid step, everything VMEM-resident.
        # ------------------------------------------------------------------- #
        kernel = functools.partial(_fused_small_kernel, eps=eps, num=num, C=C)
        out2d = pl.pallas_call(
            kernel,
            out_shape=jax.ShapeDtypeStruct((B, num * C), out_dtype),
            grid=(1,),
            in_specs=[
                pl.BlockSpec((B, Ds), lambda i: (0, 0)),
                pl.BlockSpec((Ds, num * C), lambda i: (0, 0)),
                pl.BlockSpec((1, num * C), lambda i: (0, 0)),
                pl.BlockSpec((1, C), lambda i: (0, 0)),
                pl.BlockSpec((1, C), lambda i: (0, 0)),
            ],
            out_specs=pl.BlockSpec((B, num * C), lambda i: (0, 0)),
            compiler_params=pltpu.CompilerParams(
                dimension_semantics=("arbitrary",)),
            cost_estimate=cost,
        )(seq_embeds, ws, bs, gamma, beta)
        return out2d.reshape(B, num, C)       # free view, no transpose

    # ----------------------------------------------------------------------- #
    # General streaming path: (B-tiles, num, K-tiles) grid.
    # ----------------------------------------------------------------------- #
    # Bound each weight block to ~4 MiB so double-buffering stays well inside
    # every generation's VMEM (incl. v7x 64 MiB / v5e 16 MiB-default cases).
    per_block_budget = 4 * 1024 * 1024
    max_tk = max(128, (per_block_budget // max(1, C * cbytes)) // 128 * 128)
    tk = Ds if Ds <= max_tk else _largest_divisor_tile(Ds, max_tk, 128)
    tb = B if B <= 256 else _largest_divisor_tile(B, 256, 8)

    grid = (B // tb, num, Ds // tk)
    kernel = functools.partial(_tiled_kernel, eps=eps)

    out2d = pl.pallas_call(
        kernel,
        out_shape=jax.ShapeDtypeStruct((B, num * C), out_dtype),
        grid=grid,
        in_specs=[
            pl.BlockSpec((tb, tk), lambda bi, j, k: (bi, k)),   # activations
            pl.BlockSpec((tk, C), lambda bi, j, k: (k, j)),     # weight block
            pl.BlockSpec((1, C), lambda bi, j, k: (0, j)),      # linear bias slice
            pl.BlockSpec((1, C), lambda bi, j, k: (0, 0)),      # LN gamma (resident)
            pl.BlockSpec((1, C), lambda bi, j, k: (0, 0)),      # LN beta  (resident)
        ],
        out_specs=pl.BlockSpec((tb, C), lambda bi, j, k: (bi, j)),
        scratch_shapes=[pltpu.VMEM((tb, C), jnp.float32)],      # f32 accumulator
        compiler_params=pltpu.CompilerParams(
            dimension_semantics=("parallel", "parallel", "arbitrary"),
            vmem_limit_bytes=48 * 1024 * 1024,
        ),
        cost_estimate=cost,
    )(seq_embeds, ws, bs, gamma, beta)

    return out2d.reshape(B, num, C)           # free view, no transpose


# --------------------------------------------------------------------------- #
# Reference + self-test
# --------------------------------------------------------------------------- #
def _reference(seq_embeds, params, *, num_seq_text_embeds, eps=1e-5):
    B = seq_embeds.shape[0]
    C = params["gamma"].shape[-1]
    x = seq_embeds @ params["ws"] + params["bs"]
    x = x.reshape(B, num_seq_text_embeds, C)
    mean = x.mean(-1, keepdims=True)
    var = ((x - mean) ** 2).mean(-1, keepdims=True)
    return (x - mean) * jax.lax.rsqrt(var + eps) * params["gamma"] + params["beta"]


if __name__ == "__main__":
    # Small, TPU-friendly shapes consistent with the module's forward.
    B = 2
    seq_embed_dim = 128
    cross_attention_dim = 128
    num_seq_text_embeds = 4

    key = jax.random.PRNGKey(0)
    k1, k2, k3, k4, k5 = jax.random.split(key, 5)

    seq_embeds = jax.random.normal(k1, (B, seq_embed_dim), jnp.float32)
    params = {
        "ws": jax.random.normal(
            k2, (seq_embed_dim, num_seq_text_embeds * cross_attention_dim),
            jnp.float32) * (1.0 / seq_embed_dim ** 0.5),
        "bs": 0.01 * jax.random.normal(
            k3, (num_seq_text_embeds * cross_attention_dim,), jnp.float32),
        "gamma": 1.0 + 0.1 * jax.random.normal(
            k4, (cross_attention_dim,), jnp.float32),
        "beta": 0.1 * jax.random.normal(k5, (cross_attention_dim,), jnp.float32),
    }

    ref = _reference(seq_embeds, params, num_seq_text_embeds=num_seq_text_embeds)

    # 1) f32, general tiled path (accumulator + K/B tiling) — forced.
    out_gen = jax.block_until_ready(seq_projection(
        seq_embeds, params, num_seq_text_embeds=num_seq_text_embeds,
        force_general=True))
    assert out_gen.shape == (B, num_seq_text_embeds, cross_attention_dim)
    assert jnp.allclose(out_gen, ref, atol=1e-3, rtol=1e-3), float(
        jnp.max(jnp.abs(out_gen - ref)))

    # 2) f32, small-problem single-step fast path (auto-selected here).
    out_fast = jax.block_until_ready(seq_projection(
        seq_embeds, params, num_seq_text_embeds=num_seq_text_embeds))
    assert out_fast.shape == (B, num_seq_text_embeds, cross_attention_dim)
    assert jnp.allclose(out_fast, ref, atol=1e-3, rtol=1e-3), float(
        jnp.max(jnp.abs(out_fast - ref)))

    # 3) bf16-at-rest weights (recommended production config): half the HBM
    #    weight bytes, no per-call convert; LN/bias/accumulation stay f32.
    params_bf16 = dict(params, ws=params["ws"].astype(jnp.bfloat16))
    out_bf16 = jax.block_until_ready(seq_projection(
        seq_embeds, params_bf16, num_seq_text_embeds=num_seq_text_embeds))
    assert jnp.allclose(out_bf16, ref, atol=5e-2, rtol=5e-2), float(
        jnp.max(jnp.abs(out_bf16 - ref)))

    print("KERNEL_OK")
</pallas_src>

<mosaic_0001>
module attributes {stable_mosaic.version = 11 : i64} {
  func.func @_tiled_kernel(%arg0: i32, %arg1: i32, %arg2: i32, %arg3: memref<2x128xf32, #tpu.memory_space<vmem>>, %arg4: memref<128x128xf32, #tpu.memory_space<vmem>>, %arg5: memref<1x128xf32, #tpu.memory_space<vmem>>, %arg6: memref<1x128xf32, #tpu.memory_space<vmem>>, %arg7: memref<1x128xf32, #tpu.memory_space<vmem>>, %arg8: memref<2x128xf32, #tpu.memory_space<vmem>>, %arg9: memref<2x128xf32, #tpu.memory_space<vmem>>) attributes {dimension_semantics = [#tpu.dimension_semantics<parallel>, #tpu.dimension_semantics<parallel>, #tpu.dimension_semantics<arbitrary>], iteration_bounds = array<i64: 1, 4, 1>, scalar_prefetch = 0 : i64, scratch_operands = 1 : i64, tpu.core_type = #tpu.core_type<tc>, window_params = [{transform_indices = @transform_0, window_bounds = array<i64: 2, 128>}, {transform_indices = @transform_1, window_bounds = array<i64: 128, 128>}, {transform_indices = @transform_2, window_bounds = array<i64: 1, 128>}, {pipeline_mode = #tpu.pipeline_mode<synchronous>, transform_indices = @transform_3, window_bounds = array<i64: 1, 128>}, {pipeline_mode = #tpu.pipeline_mode<synchronous>, transform_indices = @transform_4, window_bounds = array<i64: 1, 128>}, {transform_indices = @transform_5, window_bounds = array<i64: 2, 128>}]} {
    %c0_i32 = arith.constant 0 : i32
    %0 = arith.cmpi eq, %arg2, %c0_i32 : i32
    %1 = arith.extui %0 : i1 to i32
    %c0_i32_0 = arith.constant 0 : i32
    %2 = arith.cmpi ne, %1, %c0_i32_0 : i32
    scf.if %2 {
      %cst_10 = arith.constant 0.000000e+00 : f32
      %12 = vector.broadcast %cst_10 : f32 to vector<2x128xf32>
      %c0_11 = arith.constant 0 : index
      %c0_12 = arith.constant 0 : index
      %13 = vector.load %arg9[%c0_11, %c0_12] : memref<2x128xf32, #tpu.memory_space<vmem>>, vector<2x128xf32>
      tpu.vector_store %arg9[%c0_11, %c0_12], %12 {strides = array<i32>} : memref<2x128xf32, #tpu.memory_space<vmem>>, vector<2x128xf32>,
    } else {
    }
    %c0 = arith.constant 0 : index
    %c0_1 = arith.constant 0 : index
    %3 = vector.load %arg9[%c0, %c0_1] : memref<2x128xf32, #tpu.memory_space<vmem>>, vector<2x128xf32>
    %c0_2 = arith.constant 0 : index
    %c0_3 = arith.constant 0 : index
    %4 = vector.load %arg3[%c0_2, %c0_3] : memref<2x128xf32, #tpu.memory_space<vmem>>, vector<2x128xf32>
    %c0_4 = arith.constant 0 : index
    %c0_5 = arith.constant 0 : index
    %5 = vector.load %arg4[%c0_4, %c0_5] : memref<128x128xf32, #tpu.memory_space<vmem>>, vector<128x128xf32>
    %cst = arith.constant dense<0.000000e+00> : vector<2x128xf32>
    %6 = tpu.matmul %4, %5, %cst {dimension_numbers = #tpu.dot_dimension_numbers<[1], [0], [0], [1], [0, 0, 1, 1], [], []>} : vector<2x128xf32>, vector<128x128xf32>, vector<2x128xf32> -> vector<2x128xf32>
    %7 = arith.addf %3, %6 : vector<2x128xf32>
    %c0_6 = arith.constant 0 : index
    %c0_7 = arith.constant 0 : index
    %8 = vector.load %arg9[%c0_6, %c0_7] : memref<2x128xf32, #tpu.memory_space<vmem>>, vector<2x128xf32>
    tpu.vector_store %arg9[%c0_6, %c0_7], %7 {strides = array<i32>} : memref<2x128xf32, #tpu.memory_space<vmem>>, vector<2x128xf32>,
    %c0_i32_8 = arith.constant 0 : i32
    %9 = arith.cmpi eq, %arg2, %c0_i32_8 : i32
    %10 = arith.extui %9 : i1 to i32
    %c0_i32_9 = arith.constant 0 : i32
    %11 = arith.cmpi ne, %10, %c0_i32_9 : i32
    scf.if %11 {
      %c0_10 = arith.constant 0 : index
      %c0_11 = arith.constant 0 : index
      %12 = vector.load %arg9[%c0_10, %c0_11] : memref<2x128xf32, #tpu.memory_space<vmem>>, vector<2x128xf32>
      %c0_12 = arith.constant 0 : index
      %c0_13 = arith.constant 0 : index
      %13 = vector.load %arg5[%c0_12, %c0_13] : memref<1x128xf32, #tpu.memory_space<vmem>>, vector<1x128xf32>
      %14 = vector.broadcast %13 : vector<1x128xf32> to vector<2x128xf32>
      %15 = arith.addf %12, %14 : vector<2x128xf32>
      %c0_14 = arith.constant 0 : index
      %c0_15 = arith.constant 0 : index
      %16 = vector.load %arg6[%c0_14, %c0_15] : memref<1x128xf32, #tpu.memory_space<vmem>>, vector<1x128xf32>
      %c0_16 = arith.constant 0 : index
      %c0_17 = arith.constant 0 : index
      %17 = vector.load %arg7[%c0_16, %c0_17] : memref<1x128xf32, #tpu.memory_space<vmem>>, vector<1x128xf32>
      %cst_18 = arith.constant dense<0.000000e+00> : vector<2xf32>
      %18 = vector.multi_reduction <add>, %15, %cst_18 [1] : vector<2x128xf32> to vector<2xf32>
      %19 = vector.shape_cast %18 : vector<2xf32> to vector<2x1xf32>
      %cst_19 = arith.constant 1.280000e+02 : f32
      %20 = vector.broadcast %cst_19 : f32 to vector<2x1xf32>
      %21 = arith.divf %19, %20 : vector<2x1xf32>
      %22 = vector.broadcast %21 : vector<2x1xf32> to vector<2x128xf32>
      %23 = arith.subf %15, %22 : vector<2x128xf32>
      %24 = arith.mulf %23, %23 : vector<2x128xf32>
      %cst_20 = arith.constant dense<0.000000e+00> : vector<2xf32>
      %25 = vector.multi_reduction <add>, %24, %cst_20 [1] : vector<2x128xf32> to vector<2xf32>
      %26 = vector.shape_cast %25 : vector<2xf32> to vector<2x1xf32>
      %cst_21 = arith.constant 1.280000e+02 : f32
      %27 = vector.broadcast %cst_21 : f32 to vector<2x1xf32>
      %28 = arith.divf %26, %27 : vector<2x1xf32>
      %cst_22 = arith.constant 9.99999974E-6 : f32
      %29 = vector.broadcast %cst_22 : f32 to vector<2x1xf32>
      %30 = arith.addf %28, %29 : vector<2x1xf32>
      %31 = math.rsqrt %30 : vector<2x1xf32>
      %32 = vector.broadcast %31 : vector<2x1xf32> to vector<2x128xf32>
      %33 = arith.mulf %23, %32 : vector<2x128xf32>
      %34 = vector.broadcast %16 : vector<1x128xf32> to vector<2x128xf32>
      %35 = arith.mulf %33, %34 : vector<2x128xf32>
      %36 = vector.broadcast %17 : vector<1x128xf32> to vector<2x128xf32>
      %37 = arith.addf %35, %36 : vector<2x128xf32>
      %c0_23 = arith.constant 0 : index
      %c0_24 = arith.constant 0 : index
      %38 = vector.load %arg8[%c0_23, %c0_24] : memref<2x128xf32, #tpu.memory_space<vmem>>, vector<2x128xf32>
      tpu.vector_store %arg8[%c0_23, %c0_24], %37 {strides = array<i32>} : memref<2x128xf32, #tpu.memory_space<vmem>>, vector<2x128xf32>,
    } else {
    }
    return
  }
  func.func @transform_0(%arg0: i32, %arg1: i32, %arg2: i32) -> (i32, i32) {
    %c0_i32 = arith.constant 0 : i32
    return %arg0, %arg2 : i32, i32
  }
  func.func @transform_1(%arg0: i32, %arg1: i32, %arg2: i32) -> (i32, i32) {
    %c0_i32 = arith.constant 0 : i32
    return %arg2, %arg1 : i32, i32
  }
  func.func @transform_2(%arg0: i32, %arg1: i32, %arg2: i32) -> (i32, i32) {
    %c0_i32 = arith.constant 0 : i32
    %c0_i32_0 = arith.constant 0 : i32
    return %c0_i32, %arg1 : i32, i32
  }
  func.func @transform_3(%arg0: i32, %arg1: i32, %arg2: i32) -> (i32, i32) {
    %c0_i32 = arith.constant 0 : i32
    %c0_i32_0 = arith.constant 0 : i32
    %c0_i32_1 = arith.constant 0 : i32
    return %c0_i32, %c0_i32_0 : i32, i32
  }
  func.func @transform_4(%arg0: i32, %arg1: i32, %arg2: i32) -> (i32, i32) {
    %c0_i32 = arith.constant 0 : i32
    %c0_i32_0 = arith.constant 0 : i32
    %c0_i32_1 = arith.constant 0 : i32
    return %c0_i32, %c0_i32_0 : i32, i32
  }
  func.func @transform_5(%arg0: i32, %arg1: i32, %arg2: i32) -> (i32, i32) {
    %c0_i32 = arith.constant 0 : i32
    return %arg0, %arg1 : i32, i32
  }
}

</mosaic_0001>

<llo_original>
// kernel: tpu_custom_call.1
$region0: #{tpu_custom_call.1}
  #allocation0 [shape = 'u32[]', space=smem, size = 0x4, offset = 0x4, fixed_abs, tag = 'smem constant byte address 0x4 - core index']
  #allocation1 [shape = 'u32[144,128]{1,0:T(1,128)}', space=vmem, size = 0x12000, scoped, tag = 'internal scratch']
  #allocation2 [shape = 'f32[2,128]{1,0:T(2,128)}', space=vmem, size = 0x400, scoped, tag = 'scratch operand']
  %s0 = inlined_call_operand.hbm [shape: f32[2,128], index: 0, kind: input, shape index: {}]
  %s1 = inlined_call_operand.hbm [shape: f32[128,512], index: 1, kind: input, shape index: {}]
  %s2 = inlined_call_operand.vmem [shape: f32[1,512], index: 2, kind: input, shape index: {}]
  %s3 = inlined_call_operand.vmem [shape: f32[1,128], index: 3, kind: input, shape index: {}]
  %s4 = inlined_call_operand.vmem [shape: f32[1,128], index: 4, kind: input, shape index: {}]
  %s5 = inlined_call_operand.hbm [shape: f32[2,512], index: 5, kind: output, shape index: {}]
  %s6 = sld [smem:[#allocation0]]
  $region69: #{tpu_custom_call.1} parent=0
    _
  %s8 = ssub.s32 1, %s6
  %s9 = scalar_select 0, %s8, %s6
  $region1: #{tpu_custom_call.1} parent=0
    #allocation3 [shape = 'u8[1024]{0}', space=vmem, size = 0x400, scoped, tag = 'input window, operand 0, single buffered']
    #allocation4 [shape = 's32[2]{0}', space=sflag, size = 0x8, scoped, tag = 'scoped memory for tpu_custom_call.1']
    #allocation5 [shape = 's32[2]{0}', space=sflag, size = 0x8, scoped, tag = 'scoped memory for tpu_custom_call.1']
    #allocation6 [shape = 'u8[131072]{0}', space=vmem, size = 0x20000, scoped, tag = 'input window, operand 1']
    #allocation7 [shape = 's32[2]{0}', space=sflag, size = 0x8, scoped, tag = 'scoped memory for tpu_custom_call.1']
    #allocation8 [shape = 'u8[2048]{0}', space=vmem, size = 0x800, scoped, tag = 'output window, operand 0']
    %10 = vsyncpa [#allocation4], 0
    %11 = vsyncpa [#allocation7], 0
    %s12 = scalar_lea.sflag [#allocation7], 1
    %13 = vsyncpa %s12, 0
    %14 = vsyncpa [#allocation5], 0
    %s15 = scalar_lea.sflag [#allocation5], 1
    %16 = vsyncpa %s15, 0
    loop: start=0, step=1, limit=6
    $region2: #{tpu_custom_call.1} parent=1 // loop_pre_header
      _
    $region3: #{tpu_custom_call.1} parent=1 // loop_header
      %s18 = sphi 0, %s22
      %p19 = scmp.ge.s32.totalorder %s18, 6
      %s25 = sphi 0, %s44
      %s26 = sphi 0, %s40
      %s27 = sphi 0, %s36
      %s28 = sphi 0, %s25
      %s29 = sphi 0, %s26
      %s30 = sphi 0, %s27
      %s31 = sphi 0, %s28
      %s32 = sphi 0, %s29
      %s33 = sphi 0, %s30
      %s49 = sphi 0, %s51
      %s52 = sphi 0, %s49
      %s53 = sphi 0, %s52
      %s69 = sphi 0, %s53
      %s77 = sphi 0, %s79
      %s80 = sphi 0, %s77
      %s81 = sphi 0, %s80
      %s97 = sphi 0, %s81
      %s103 = sphi 0, %s105
      %s106 = sphi 0, %s103
      %s107 = sphi 0, %s106
      %s123 = sphi 0, %s107
      %s127 = sphi 0, %s127
      %s129 = sphi 0, %s127
      %s130 = sphi 0, %s129
      %s144 = sphi 0, %s130
      %s148 = sphi 0, %s148
      %s150 = sphi 0, %s148
      %s151 = sphi 0, %s150
      %s165 = sphi 0, %s151
      %s173 = sphi 0, %s175
      %s176 = sphi 0, %s173
      %s177 = sphi 0, %s176
      %s193 = sphi 0, %s177
    $region4: #{tpu_custom_call.1} parent=1 // loop_header_branch
      %21 = sbr.rel (%p19) target = $region8
    $region5: #{tpu_custom_call.1} parent=1 // loop_body
      %s23 = ssub.s32 %s18, 1
      %s24 = ssub.s32 %s18, 2
      %s34 = sadd.s32 1, %s27
      %p35 = scmp.ge.s32.totalorder %s34, 1
      %s36 = scalar_select %p35, 0, %s34
      %s37 = sadd.s32 1, %s26
      %s38 = scalar_select %p35, %s37, %s26
      %p39 = scmp.ge.s32.totalorder %s38, 4
      %s40 = scalar_select %p39, 0, %s38
      %s41 = sadd.s32 1, %s25
      %s42 = scalar_select %p39, %s41, %s25
      %p43 = scmp.ge.s32.totalorder %s42, 1
      %s44 = scalar_select %p43, 0, %s42
      %s45 = ssub.s32 %s25, %s44
      %s46 = ssub.s32 %s27, %s36
      %s47 = sor.u32 %s45, %s46
      %p48 = scmp.eq.s32.totalorder %s47, 0
      %s50 = sadd.s32 %s49, 1
      %s51 = scalar_select %p48, %s49, %s50
      %p54 = pneg %p48
      %p55 = scmp.eq.s32.totalorder %s18, 3
      %p56 = por %p54, %p55
      %p57 = scmp.ne.s32.totalorder %s49, %s52
      %p58 = scmp.eq.s32.totalorder %s18, 0
      %p59 = por %p57, %p58
      %p60 = scmp.ne.s32.totalorder %s49, %s52
      %p61 = scmp.eq.s32.totalorder %s23, 3
      %p62 = por %p60, %p61
      %p63 = scmp.ne.s32.totalorder %s52, %s53
      %p64 = scmp.eq.s32.totalorder %s23, 0
      %p65 = por %p63, %p64
      %p66 = scmp.ne.s32.totalorder %s52, %s53
      %p67 = scmp.eq.s32.totalorder %s24, 3
      %p68 = por %p66, %p67
      %p70 = scmp.ne.s32.totalorder %s53, %s69
      %p71 = scmp.eq.s32.totalorder %s24, 0
      %p72 = por %p70, %p71
      %s73 = ssub.s32 %s27, %s36
      %s74 = ssub.s32 %s26, %s40
      %s75 = sor.u32 %s73, %s74
      %p76 = scmp.eq.s32.totalorder %s75, 0
      %s78 = sadd.s32 %s77, 1
      %s79 = scalar_select %p76, %s77, %s78
      %p82 = pneg %p76
      %p83 = scmp.eq.s32.totalorder %s18, 3
      %p84 = por %p82, %p83
      %p85 = scmp.ne.s32.totalorder %s77, %s80
      %p86 = scmp.eq.s32.totalorder %s18, 0
      %p87 = por %p85, %p86
      %p88 = scmp.ne.s32.totalorder %s77, %s80
      %p89 = scmp.eq.s32.totalorder %s23, 3
      %p90 = por %p88, %p89
      %p91 = scmp.ne.s32.totalorder %s80, %s81
      %p92 = scmp.eq.s32.totalorder %s23, 0
      %p93 = por %p91, %p92
      %p94 = scmp.ne.s32.totalorder %s80, %s81
      %p95 = scmp.eq.s32.totalorder %s24, 3
      %p96 = por %p94, %p95
      %p98 = scmp.ne.s32.totalorder %s81, %s97
      %p99 = scmp.eq.s32.totalorder %s24, 0
      %p100 = por %p98, %p99
      %s101 = ssub.s32 %s26, %s40
      %p102 = scmp.eq.s32.totalorder %s101, 0
      %s104 = sadd.s32 %s103, 1
      %s105 = scalar_select %p102, %s103, %s104
      %p108 = pneg %p102
      %p109 = scmp.eq.s32.totalorder %s18, 3
      %p110 = por %p108, %p109
      %p111 = scmp.ne.s32.totalorder %s103, %s106
      %p112 = scmp.eq.s32.totalorder %s18, 0
      %p113 = por %p111, %p112
      %p114 = scmp.ne.s32.totalorder %s103, %s106
      %p115 = scmp.eq.s32.totalorder %s23, 3
      %p116 = por %p114, %p115
      %p117 = scmp.ne.s32.totalorder %s106, %s107
      %p118 = scmp.eq.s32.totalorder %s23, 0
      %p119 = por %p117, %p118
      %p120 = scmp.ne.s32.totalorder %s106, %s107
      %p121 = scmp.eq.s32.totalorder %s24, 3
      %p122 = por %p120, %p121
      %p124 = scmp.ne.s32.totalorder %s107, %s123
      %p125 = scmp.eq.s32.totalorder %s24, 0
      %p126 = por %p124, %p125
      %s128 = sadd.s32 %s127, 1
      %p131 = scmp.eq.s32.totalorder %s18, 3
      %p132 = scmp.ne.s32.totalorder %s127, %s129
      %p133 = scmp.eq.s32.totalorder %s18, 0
      %p134 = por %p132, %p133
      %p135 = scmp.ne.s32.totalorder %s127, %s129
      %p136 = scmp.eq.s32.totalorder %s23, 3
      %p137 = por %p135, %p136
      %p138 = scmp.ne.s32.totalorder %s129, %s130
      %p139 = scmp.eq.s32.totalorder %s23, 0
      %p140 = por %p138, %p139
      %p141 = scmp.ne.s32.totalorder %s129, %s130
      %p142 = scmp.eq.s32.totalorder %s24, 3
      %p143 = por %p141, %p142
      %p145 = scmp.ne.s32.totalorder %s130, %s144
      %p146 = scmp.eq.s32.totalorder %s24, 0
      %p147 = por %p145, %p146
      %s149 = sadd.s32 %s148, 1
      %p152 = scmp.eq.s32.totalorder %s18, 3
      %p153 = scmp.ne.s32.totalorder %s148, %s150
      %p154 = scmp.eq.s32.totalorder %s18, 0
      %p155 = por %p153, %p154
      %p156 = scmp.ne.s32.totalorder %s148, %s150
      %p157 = scmp.eq.s32.totalorder %s23, 3
      %p158 = por %p156, %p157
      %p159 = scmp.ne.s32.totalorder %s150, %s151
      %p160 = scmp.eq.s32.totalorder %s23, 0
      %p161 = por %p159, %p160
      %p162 = scmp.ne.s32.totalorder %s150, %s151
      %p163 = scmp.eq.s32.totalorder %s24, 3
      %p164 = por %p162, %p163
      %p166 = scmp.ne.s32.totalorder %s151, %s165
      %p167 = scmp.eq.s32.totalorder %s24, 0
      %p168 = por %p166, %p167
      %s169 = ssub.s32 %s25, %s44
      %s170 = ssub.s32 %s26, %s40
      %s171 = sor.u32 %s169, %s170
      %p172 = scmp.eq.s32.totalorder %s171, 0
      %s174 = sadd.s32 %s173, 1
      %s175 = scalar_select %p172, %s173, %s174
      %p178 = pneg %p172
      %p179 = scmp.eq.s32.totalorder %s18, 3
      %p180 = por %p178, %p179
      %p181 = scmp.ne.s32.totalorder %s173, %s176
      %p182 = scmp.eq.s32.totalorder %s18, 0
      %p183 = por %p181, %p182
      %p184 = scmp.ne.s32.totalorder %s173, %s176
      %p185 = scmp.eq.s32.totalorder %s23, 3
      %p186 = por %p184, %p185
      %p187 = scmp.ne.s32.totalorder %s176, %s177
      %p188 = scmp.eq.s32.totalorder %s23, 0
      %p189 = por %p187, %p188
      %p190 = scmp.ne.s32.totalorder %s176, %s177
      %p191 = scmp.eq.s32.totalorder %s24, 3
      %p192 = por %p190, %p191
      %p194 = scmp.ne.s32.totalorder %s177, %s193
      %p195 = scmp.eq.s32.totalorder %s24, 0
      %p196 = por %p194, %p195
      %p197 = scmp.le.s32.totalorder 1, %s18
      %p198 = scmp.lt.s32.totalorder %s18, 5
      %p199 = pnand %p197, %p198
      %p200 = pneg %p199
      // Predicated region
      $region9: #{tpu_custom_call.1} parent=5 // pred_check
        _
      $region10: #{tpu_custom_call.1} parent=5 // pred_check_branch
        %202 = sbr.rel (%p199) target = $region12
      $region11: #{tpu_custom_call.1} parent=5 // pred_region
        %s203 = ssub.s32 %s18, 1
        // Predicated region
        $region13: #{tpu_custom_call.1} parent=11 // pred_check
          %p204 = pneg %p65
        $region14: #{tpu_custom_call.1} parent=11 // pred_check_branch
          %206 = sbr.rel (%p204) target = $region16
        $region15: #{tpu_custom_call.1} parent=11 // pred_region
          %s208 = ssub.s32 32, 32
          %209 = vsyncadd [#allocation4], %s208
          %s210 = sadd.s32 %s30, %s28
          %s211 = smul.addr %s210, 32
          %s212 = scalar_lea.hbm %s0, %s211
          %s214 = sshll.u32 [#allocation3], 4
          %s215 = int_to_ptr.vmem [resolvable:$true] %s214
          %217 = dma.hbm_to_vmem [thread:$0]  %s212, 32, %s215, [#allocation4]
        $region16: #{tpu_custom_call.1} parent=11 // pred_fallthru
          _
        // Predicated region
        $region17: #{tpu_custom_call.1} parent=11 // pred_check
          %p218 = pneg %p140
        $region18: #{tpu_custom_call.1} parent=11 // pred_check_branch
          %220 = sbr.rel (%p218) target = $region20
        $region19: #{tpu_custom_call.1} parent=11 // pred_region
          _
        $region20: #{tpu_custom_call.1} parent=11 // pred_fallthru
          _
        // Predicated region
        $region21: #{tpu_custom_call.1} parent=11 // pred_check
          %p221 = pneg %p161
        $region22: #{tpu_custom_call.1} parent=11 // pred_check_branch
          %223 = sbr.rel (%p221) target = $region24
        $region23: #{tpu_custom_call.1} parent=11 // pred_region
          _
        $region24: #{tpu_custom_call.1} parent=11 // pred_fallthru
          _
      $region12: #{tpu_custom_call.1} parent=5 // pred_fallthru
        _
      %p224 = scmp.lt.s32.totalorder %s18, 4
      // Predicated region
      $region25: #{tpu_custom_call.1} parent=5 // pred_check
        %p225 = pneg %p224
      $region26: #{tpu_custom_call.1} parent=5 // pred_check_branch
        %227 = sbr.rel (%p225) target = $region28
      $region27: #{tpu_custom_call.1} parent=5 // pred_region
        // Predicated region
        $region29: #{tpu_custom_call.1} parent=27 // pred_check
          %p228 = pneg %p87
        $region30: #{tpu_custom_call.1} parent=27 // pred_check_branch
          %230 = sbr.rel (%p228) target = $region32
        $region31: #{tpu_custom_call.1} parent=27 // pred_region
          %s231 = sand.u32 %s77, 1
          %s232 = scalar_lea.sflag [#allocation7], %s231
          %s233 = sand.u32 %s77, 1
          %s234 = smul.addr %s233, 128
          %s235 = scalar_lea.vmem [#allocation6], %s234
          %s236 = smul.u32 16, %s27
          %s238 = ssub.s32 2048, 2048
          %239 = vsyncadd %s232, %s238
          %s240 = smul.addr %s236, 4
          %s241 = sadd.s32 %s26, %s240
          %s242 = smul.addr %s241, 128
          %s243 = scalar_lea.hbm %s1, %s242
          %s244 = sshll.u32 %s235, 4
          %s245 = int_to_ptr.vmem [resolvable:$true] %s244
          %250 = dma.hbm_to_vmem [thread:$0]  %s243, 2048, %s245, %s232, 512, 128, 8
        $region32: #{tpu_custom_call.1} parent=27 // pred_fallthru
          _
        // Predicated region
        $region33: #{tpu_custom_call.1} parent=27 // pred_check
          %p251 = pneg %p113
        $region34: #{tpu_custom_call.1} parent=27 // pred_check_branch
          %253 = sbr.rel (%p251) target = $region36
        $region35: #{tpu_custom_call.1} parent=27 // pred_region
          %p254 = scmp.lt.s32.totalorder %s26, 3
          %s255 = scalar_select %p254, %s26, 3
          %s256 = scalar_lea.vmem %s2, %s255
        $region36: #{tpu_custom_call.1} parent=27 // pred_fallthru
          _
      $region28: #{tpu_custom_call.1} parent=5 // pred_fallthru
        _
      %p257 = scmp.le.s32.totalorder 1, %s18
      %p258 = scmp.lt.s32.totalorder %s18, 5
      %p259 = pnand %p257, %p258
      %p260 = pneg %p259
      // Predicated region
      $region37: #{tpu_custom_call.1} parent=5 // pred_check
        _
      $region38: #{tpu_custom_call.1} parent=5 // pred_check_branch
        %262 = sbr.rel (%p259) target = $region40
      $region39: #{tpu_custom_call.1} parent=5 // pred_region
        %s263 = ssub.s32 %s18, 1
        // Predicated region
        $region41: #{tpu_custom_call.1} parent=39 // pred_check
          %p264 = pneg %p65
        $region42: #{tpu_custom_call.1} parent=39 // pred_check_branch
          %266 = sbr.rel (%p264) target = $region44
        $region43: #{tpu_custom_call.1} parent=39 // pred_region
          %267 = dma.done [#allocation4], 32
        $region44: #{tpu_custom_call.1} parent=39 // pred_fallthru
          _
        %s268 = sand.u32 %s80, 1
        %s269 = scalar_lea.sflag [#allocation7], %s268
        %s270 = sand.u32 %s80, 1
        %s271 = smul.addr %s270, 128
        %s272 = scalar_lea.vmem [#allocation6], %s271
        // Predicated region
        $region45: #{tpu_custom_call.1} parent=39 // pred_check
          %p273 = pneg %p93
        $region46: #{tpu_custom_call.1} parent=39 // pred_check_branch
          %275 = sbr.rel (%p273) target = $region48
        $region47: #{tpu_custom_call.1} parent=39 // pred_region
          %276 = dma.done %s269, 2048
        $region48: #{tpu_custom_call.1} parent=39 // pred_fallthru
          _
        %p277 = pneg %p65
        %p278 = pneg %p62
        %s279 = sand.u32 %s80, 1
        %s280 = scalar_lea.sflag [#allocation7], %s279
        %s281 = sand.u32 %s80, 1
        %s282 = smul.addr %s281, 128
        %s283 = scalar_lea.vmem [#allocation6], %s282
        %p284 = pneg %p93
        %p285 = pneg %p90
        %p286 = scmp.lt.s32.totalorder %s29, 3
        %s287 = scalar_select %p286, %s29, 3
        %s288 = scalar_lea.vmem %s2, %s287
        %p289 = pneg %p119
        %p290 = pneg %p116
        %p291 = pneg %p140
        %p292 = pneg %p137
        %p293 = pneg %p161
        %p294 = pneg %p158
        %p295 = pneg %p189
        %p296 = pneg %p186
        %s297 = sand.u32 %s176, 1
        %s298 = scalar_lea.sflag [#allocation5], %s297
        %s299 = sand.u32 %s176, 1
        %s300 = smul.addr %s299, 2
        %s301 = scalar_lea.vmem [#allocation8], %s300
        %s302 = smul.u32 16, %s30
        %p303 = scmp.lt.s32.totalorder %s29, 3
        %s304 = scalar_select %p303, %s29, 3
        %s305 = scalar_lea.vmem %s2, %s304
        %p306 = scmp.eq.s32.totalorder %s30, 0
        // Predicated region
        $region49: #{tpu_custom_call.1} parent=39 // pred_check
          %p307 = pneg %p306
        $region50: #{tpu_custom_call.1} parent=39 // pred_check_branch
          %309 = sbr.rel (%p307) target = $region52
        $region51: #{tpu_custom_call.1} parent=39 // pred_region
          %310 = vst [vmem:[#allocation2] sm:$0x3] 0.0
        $region52: #{tpu_custom_call.1} parent=39 // pred_fallthru
          _
        %v311 = vld [vmem:[#allocation2] sm:$0x3]
        %v312 = vld [vmem:[#allocation3] sm:$0x3]
        %v313 = vld [vmem:[%s272] sm:$0xff]
        %v314 = vld [vmem:[%s272 + $0x8] sm:$0xff]
        %v315 = vld [vmem:[%s272 + $0x10] sm:$0xff]
        %v316 = vld [vmem:[%s272 + $0x18] sm:$0xff]
        %v317 = vld [vmem:[%s272 + $0x20] sm:$0xff]
        %v318 = vld [vmem:[%s272 + $0x28] sm:$0xff]
        %v319 = vld [vmem:[%s272 + $0x30] sm:$0xff]
        %v320 = vld [vmem:[%s272 + $0x38] sm:$0xff]
        %v321 = vld [vmem:[%s272 + $0x40] sm:$0xff]
        %v322 = vld [vmem:[%s272 + $0x48] sm:$0xff]
        %v323 = vld [vmem:[%s272 + $0x50] sm:$0xff]
        %v324 = vld [vmem:[%s272 + $0x58] sm:$0xff]
        %v325 = vld [vmem:[%s272 + $0x60] sm:$0xff]
        %v326 = vld [vmem:[%s272 + $0x68] sm:$0xff]
        %v327 = vld [vmem:[%s272 + $0x70] sm:$0xff]
        %v328 = vld [vmem:[%s272 + $0x78] sm:$0xff]
        %329 = vmatprep.subr.mxu0 0.0
        %330 = vmatpush1.msra.mxu0 %v313
        %331 = vmatprep.subr.mxu0 0.0
        %332 = vmatpush1.msra.mxu0 %v314
        %333 = vmatprep.subr.mxu0 0.0
        %334 = vmatpush1.msra.mxu0 %v315
        %335 = vmatprep.subr.mxu0 0.0
        %336 = vmatpush1.msra.mxu0 %v316
        %337 = vmatprep.subr.mxu0 0.0
        %338 = vmatpush1.msra.mxu0 %v317
        %339 = vmatprep.subr.mxu0 0.0
        %340 = vmatpush1.msra.mxu0 %v318
        %341 = vmatprep.subr.mxu0 0.0
        %342 = vmatpush1.msra.mxu0 %v319
        %343 = vmatprep.subr.mxu0 0.0
        %344 = vmatpush1.msra.mxu0 %v320
        %345 = vmatprep.subr.mxu0 0.0
        %346 = vmatpush1.msra.mxu0 %v321
        %347 = vmatprep.subr.mxu0 0.0
        %348 = vmatpush1.msra.mxu0 %v322
        %349 = vmatprep.subr.mxu0 0.0
        %350 = vmatpush1.msra.mxu0 %v323
        %351 = vmatprep.subr.mxu0 0.0
        %352 = vmatpush1.msra.mxu0 %v324
        %353 = vmatprep.subr.mxu0 0.0
        %354 = vmatpush1.msra.mxu0 %v325
        %355 = vmatprep.subr.mxu0 0.0
        %356 = vmatpush1.msra.mxu0 %v326
        %357 = vmatprep.subr.mxu0 0.0
        %358 = vmatpush1.msra.mxu0 %v327
        %359 = vmatprep.subr.mxu0 0.0
        %360 = vmatpush1.msra.mxu0 %v328
        %361 = vmatprep.subr.mxu0 0.0
        %362 = vmatpush1.msra.mxu0 0.0
        %363 = vmatprep.subr.mxu0 0.0
        %364 = vmatpush1.msra.mxu0 0.0
        %365 = vmatprep.subr.mxu0 0.0
        %366 = vmatpush1.msra.mxu0 0.0
        %367 = vmatprep.subr.mxu0 0.0
        %368 = vmatpush1.msra.mxu0 0.0
        %369 = vmatprep.subr.mxu0 0.0
        %370 = vmatpush1.msra.mxu0 0.0
        %371 = vmatprep.subr.mxu0 0.0
        %372 = vmatpush1.msra.mxu0 0.0
        %373 = vmatprep.subr.mxu0 0.0
        %374 = vmatpush1.msra.mxu0 0.0
        %375 = vmatprep.subr.mxu0 0.0
        %376 = vmatpush1.msra.mxu0 0.0
        %377 = vmatprep.subr.mxu0 0.0
        %378 = vmatpush1.msra.mxu0 0.0
        %379 = vmatprep.subr.mxu0 0.0
        %380 = vmatpush1.msra.mxu0 0.0
        %381 = vmatprep.subr.mxu0 0.0
        %382 = vmatpush1.msra.mxu0 0.0
        %383 = vmatprep.subr.mxu0 0.0
        %384 = vmatpush1.msra.mxu0 0.0
        %385 = vmatprep.subr.mxu0 0.0
        %386 = vmatpush1.msra.mxu0 0.0
        %387 = vmatprep.subr.mxu0 0.0
        %388 = vmatpush1.msra.mxu0 0.0
        %389 = vmatprep.subr.mxu0 0.0
        %390 = vmatpush1.msra.mxu0 0.0
        %391 = vmatprep.subr.mxu0 0.0
        %392 = vmatpush1.msra.mxu0 0.0
        %393 = vmatprep.mubr.f32.mxu0 0.0
        %394 = vmatmul.mubr.f32.gmra.mrb[0].mxu0 %v312
        %v395 = vpop.f32.mrb[0].mxu0
        %v396 = vadd.f32 0.0, %v395
        %v397 = vpop.f32.mrb[0].mxu0
        %398 = vdwg.mxu0
        %v399 = vadd.f32 %v311, %v396
        %400 = vst [vmem:[#allocation2] sm:$0x3] %v399
        // Predicated region
        $region53: #{tpu_custom_call.1} parent=39 // pred_check
          %p401 = pneg %p306
        $region54: #{tpu_custom_call.1} parent=39 // pred_check_branch
          %403 = sbr.rel (%p401) target = $region56
        $region55: #{tpu_custom_call.1} parent=39 // pred_region
          %v404 = vld [vmem:[#allocation2] sm:$0x3]
          %v405 = vld [vmem:[%s305] sm:$0x1]
          %v407 = vlaneseq
          %v408 = vshrl.u32 %v407, 7
          %v409 = vsub.s32 0, %v408
          %v410 = vrot.slane %v405, %v409
          %v412 = vadd.f32 %v404, %v410
          %v413 = vld [vmem:[%s3] sm:$0x1]
          %v414 = vld [vmem:[%s4] sm:$0x1]
          %vm415 = vcmask 1041408
          %v416 = vsel %vm415, %v412, 0.0
          %417 = vadd.xlane.f32.xlu0 %v416
          %v418 = vpop.xlane.xlu0 %417
          %v419 = vrcp.pop 128.0
          %v420 = vmul.f32 %v418, %v419
          %v421 = vsub.f32 %v412, %v420
          %v422 = vmul.f32 %v421, %v421
          %v423 = vsel %vm415, %v422, 0.0
          %424 = vadd.xlane.f32.xlu0 %v423
          %v425 = vpop.xlane.xlu0 %424
          %v426 = vmul.f32 %v425, %v419
          %v427 = vadd.f32 %v426, 1e-05
          %v428 = vrsqrt.pop %v427
          %v429 = vmul.f32 %v421, %v428
          %v431 = vlaneseq
          %v432 = vshrl.u32 %v431, 7
          %v433 = vsub.s32 0, %v432
          %v434 = vrot.slane %v413, %v433
          %v436 = vmul.f32 %v429, %v434
          %v438 = vlaneseq
          %v439 = vshrl.u32 %v438, 7
          %v440 = vsub.s32 0, %v439
          %v441 = vrot.slane %v414, %v440
          %v443 = vadd.f32 %v436, %v441
          %444 = vst [vmem:[%s301] sm:$0x3] %v443
        $region56: #{tpu_custom_call.1} parent=39 // pred_fallthru
          _
        %s445 = sand.u32 %s176, 1
        %s446 = scalar_lea.sflag [#allocation5], %s445
        %s447 = sand.u32 %s176, 1
        %s448 = smul.addr %s447, 2
        %s449 = scalar_lea.vmem [#allocation8], %s448
        // Predicated region
        $region57: #{tpu_custom_call.1} parent=39 // pred_check
          %p450 = pneg %p186
        $region58: #{tpu_custom_call.1} parent=39 // pred_check_branch
          %452 = sbr.rel (%p450) target = $region60
        $region59: #{tpu_custom_call.1} parent=39 // pred_region
          %s454 = ssub.s32 32, 32
          %455 = vsyncadd %s446, %s454
          %s456 = smul.addr %s28, 4
          %s457 = sadd.s32 %s29, %s456
          %s458 = smul.addr %s457, 32
          %s459 = scalar_lea.hbm %s5, %s458
          %s461 = sshll.u32 %s449, 4
          %s462 = int_to_ptr.vmem [resolvable:$true] %s461
          %464 = dma.vmem_to_hbm [thread:$0]  %s462, 32, %s459, %s446
        $region60: #{tpu_custom_call.1} parent=39 // pred_fallthru
          _
      $region40: #{tpu_custom_call.1} parent=5 // pred_fallthru
        _
      %p465 = scmp.le.s32.totalorder 2, %s18
      // Predicated region
      $region61: #{tpu_custom_call.1} parent=5 // pred_check
        %p466 = pneg %p465
      $region62: #{tpu_custom_call.1} parent=5 // pred_check_branch
        %468 = sbr.rel (%p466) target = $region64
      $region63: #{tpu_custom_call.1} parent=5 // pred_region
        %s469 = ssub.s32 %s18, 2
        // Predicated region
        $region65: #{tpu_custom_call.1} parent=63 // pred_check
          %p470 = pneg %p192
        $region66: #{tpu_custom_call.1} parent=63 // pred_check_branch
          %472 = sbr.rel (%p470) target = $region68
        $region67: #{tpu_custom_call.1} parent=63 // pred_region
          %s473 = sand.u32 %s177, 1
          %s474 = scalar_lea.sflag [#allocation5], %s473
          %s475 = sand.u32 %s177, 1
          %s476 = smul.addr %s475, 2
          %s477 = scalar_lea.vmem [#allocation8], %s476
          %478 = dma.done %s474, 32
        $region68: #{tpu_custom_call.1} parent=63 // pred_fallthru
          _
      $region64: #{tpu_custom_call.1} parent=5 // pred_fallthru
        _
    $region6: #{tpu_custom_call.1} parent=1 // loop_footer
      %s22 = sadd.s32 1, %s18
    $region7: #{tpu_custom_call.1} parent=1 // loop_footer_branch
      %17 = sbr.rel target = $region3
    $region8: #{tpu_custom_call.1} parent=1 // loop_exit
      _
    %479 = vsyncpa [#allocation4], 1
    %s480 = scalar_lea.sflag [#allocation4], 1
    %481 = vsyncpa %s480, 1
    %482 = vsyncpa [#allocation7], 1
    %s483 = scalar_lea.sflag [#allocation7], 1
    %484 = vsyncpa %s483, 1
    %485 = vsyncpa [#allocation5], 1
    %s486 = scalar_lea.sflag [#allocation5], 1
    %487 = vsyncpa %s486, 1

</llo_original>
